<compile_context>
chip_gen: v5e
topology: v5e:2x2
jax: 0.10.0
libtpu: 0.0.40
codegen_flags: <defaults>
</compile_context>

<pallas_src>
from typing import NamedTuple

import jax
import jax.numpy as jnp
from jax.experimental import pallas as pl
from jax.experimental.pallas import tpu as pltpu


def _round_up(x, m):
    return ((x + m - 1) // m) * m


def _vmem_budget_bytes():
    """Usable VMEM budget with headroom for Mosaic internal scratch."""
    cap = 64 * 1024 * 1024  # conservative default (v7x physical VMEM per TC)
    try:
        info = pltpu.get_tpu_info()
        for attr in ("vmem_capacity_bytes", "vmem_bytes", "vmem_size_bytes"):
            v = getattr(info, attr, None)
            if v:
                cap = int(v)
                break
    except Exception:
        pass
    # ~0.75 * physical: ~48 MiB on v7x, ~96 MiB on v5e/v6e, capped at 100 MiB.
    return min(int(cap * 0.75), 100 * 1024 * 1024)


class SwiGLUParams(NamedTuple):
    """Pre-padded, pre-cast, pre-interleaved SwiGLU weights (built once)."""
    w_uv: jax.Array   # (width_p, n_l * 2 * tl), compute dtype, per-tile [u|v]
    b_uv: jax.Array   # (1, n_l * 2 * tl), f32, per-tile [b_u|b_v]
    w_d: jax.Array    # (L_p, width_p), compute dtype
    b_d: jax.Array    # (1, width_p), f32
    width: int        # unpadded feature width
    tl: int           # L tile size (tl == L_p  =>  weights VMEM-resident)


def prepare_swiglu_params(w_up, b_up, w_down, b_down, *, block_l=512,
                          compute_dtype=jnp.bfloat16, max_resident_bytes=None,
                          vmem_budget=None):
    """One-time weight prep (hoisted out of the hot path).

    Layout convention: w_up is (width, 2*large_width) and w_down is
    (large_width, width), i.e. the transpose of torch's nn.Linear.weight, so
    the kernel computes x @ W + b directly. Biases may be 1-D (torch style).
    """
    width, two_L = w_up.shape
    L = two_L // 2
    b_up = jnp.asarray(b_up).reshape(1, two_L)
    b_down = jnp.asarray(b_down).reshape(1, width)

    cbytes = jnp.dtype(compute_dtype).itemsize
    budget = _vmem_budget_bytes() if vmem_budget is None else vmem_budget
    if max_resident_bytes is None:
        max_resident_bytes = budget // 4  # double-buffer-safe resident cap

    width_p = _round_up(width, 128)            # lane-dense feature dim
    L_128 = _round_up(L, 128)

    total_w_bytes = 3 * width_p * L_128 * cbytes   # W_u + W_v + W_down
    if total_w_bytes <= max_resident_bytes:
        tl = L_128                                 # resident: single L tile
    else:
        tl = _round_up(min(block_l, L_128), 128)
        # Keep the double-buffered per-step weight slab within ~1/3 of budget.
        while tl > 128 and 2 * 3 * width_p * tl * cbytes > budget // 3:
            tl = _round_up(max(128, tl // 2), 128)

    L_p = _round_up(L, tl)
    n_l = L_p // tl
    pad_w, pad_l = width_p - width, L_p - L

    w_u = jnp.pad(w_up[:, :L], ((0, pad_w), (0, pad_l)))
    w_v = jnp.pad(w_up[:, L:], ((0, pad_w), (0, pad_l)))
    b_u = jnp.pad(b_up[:, :L], ((0, 0), (0, pad_l)))
    b_v = jnp.pad(b_up[:, L:], ((0, 0), (0, pad_l)))
    w_d = jnp.pad(w_down, ((0, pad_l), (0, pad_w)))
    b_d = jnp.pad(b_down, ((0, 0), (0, pad_w)))

    # Interleave u/v per L-tile so each grid step reads one contiguous
    # (width_p, 2*tl) slab -> one fused up-projection dot per step.
    w_uv = jnp.concatenate(
        [w_u.reshape(width_p, n_l, tl), w_v.reshape(width_p, n_l, tl)],
        axis=-1).reshape(width_p, n_l * 2 * tl)
    b_uv = jnp.concatenate(
        [b_u.reshape(1, n_l, tl), b_v.reshape(1, n_l, tl)],
        axis=-1).reshape(1, n_l * 2 * tl)

    return SwiGLUParams(
        w_uv=w_uv.astype(compute_dtype),
        b_uv=b_uv.astype(jnp.float32),
        w_d=w_d.astype(compute_dtype),
        b_d=b_d.astype(jnp.float32),
        width=int(width),
        tl=int(tl),
    )


# --------------------------- kernels ----------------------------------------


def _swiglu_resident_kernel(x_ref, wuv_ref, buv_ref, wd_ref, bd_ref, o_ref):
    """All weights VMEM-resident (constant index maps); 1-D batch grid."""
    L_p = wd_ref.shape[0]
    x = x_ref[...].astype(wuv_ref.dtype)           # cast hides under the MXU
    h = jnp.dot(x, wuv_ref[...],
                preferred_element_type=jnp.float32) + buv_ref[...]
    u, v = h[:, :L_p], h[:, L_p:]                  # lane-aligned static slices
    g = u * (v * jax.nn.sigmoid(v))                # SwiGLU gating in f32
    o_ref[...] = (jnp.dot(g.astype(wd_ref.dtype), wd_ref[...],
                          preferred_element_type=jnp.float32)
                  + bd_ref[...]).astype(o_ref.dtype)


def _swiglu_stream_kernel(x_ref, wuv_ref, buv_ref, wd_ref, bd_ref, o_ref,
                          acc_ref):
    """L streamed as an inner reduction axis; f32 VMEM accumulator."""
    l = pl.program_id(1)
    tl = wd_ref.shape[0]

    x = x_ref[...].astype(wuv_ref.dtype)
    h = jnp.dot(x, wuv_ref[...],
                preferred_element_type=jnp.float32) + buv_ref[...]
    u, v = h[:, :tl], h[:, tl:]
    g = u * (v * jax.nn.sigmoid(v))
    part = jnp.dot(g.astype(wd_ref.dtype), wd_ref[...],
                   preferred_element_type=jnp.float32)

    @pl.when(l == 0)
    def _():
        acc_ref[...] = part          # write, not zero-init + accumulate

    @pl.when(l > 0)
    def _():
        acc_ref[...] += part

    @pl.when(l == pl.num_programs(1) - 1)
    def _():
        o_ref[...] = (acc_ref[...] + bd_ref[...]).astype(o_ref.dtype)


# --------------------------- wrapper -----------------------------------------


def swiglu_apply(x, params: SwiGLUParams, *, block_batch=512):
    """SwiGLU forward on the last dim of x, using prepared params."""
    w_uv, b_uv, w_d, b_d = params.w_uv, params.b_uv, params.w_d, params.b_d
    width, tl = params.width, params.tl
    compute_dtype = w_uv.dtype
    L_p, width_p = w_d.shape
    n_l = L_p // tl
    resident = (n_l == 1)

    if x.shape[-1] != width:
        raise ValueError(f"expected last dim {width}, got {x.shape[-1]}")
    lead = x.shape[:-1]
    x2 = x.reshape(-1, width)
    B = x2.shape[0]
    out_dtype = x.dtype

    cbytes = jnp.dtype(compute_dtype).itemsize
    x_bytes = jnp.dtype(x.dtype).itemsize
    o_bytes = jnp.dtype(out_dtype).itemsize
    align = 16 if cbytes < 4 else 8              # bf16 packs 2 rows / sublane
    budget = _vmem_budget_bytes()

    bm = min(block_batch, _round_up(B, align))
    # >=2 batch tiles when the batch allows, so v7x's 2 TCs both get work.
    if B > align and pl.cdiv(B, bm) < 2:
        bm = _round_up(pl.cdiv(B, 2), align)

    weight_foot = 2 * 3 * width_p * tl * cbytes  # double-buffer accounting

    def footprint(m):
        f = 2 * m * width_p * (x_bytes + o_bytes)  # x / out double buffers
        f += weight_foot
        f += 2 * m * 2 * tl * 4                    # h / g f32 temporaries
        if not resident:
            f += m * width_p * 4                   # f32 accumulator scratch
        return f

    while bm > 2 * align and footprint(bm) > budget:
        bm = max(align, _round_up(bm // 2, align))

    B_p = _round_up(B, bm)
    pad_b, pad_w = B_p - B, width_p - width
    if pad_b or pad_w:
        x2 = jnp.pad(x2, ((0, pad_b), (0, pad_w)))
    # x stays in its native dtype; the bf16 cast happens inside the kernel.

    n_bt = B_p // bm
    weight_bytes = (w_uv.size + w_d.size) * cbytes
    cost = pl.CostEstimate(
        flops=6 * B_p * width_p * L_p,                   # up + down matmuls
        transcendentals=B_p * L_p,                       # sigmoid
        bytes_accessed=(x2.size * x_bytes
                        + weight_bytes * (1 if resident else n_bt)
                        + (b_uv.size + b_d.size) * 4
                        + B_p * width_p * o_bytes),
    )

    if resident:
        grid = (n_bt,)
        in_specs = [
            pl.BlockSpec((bm, width_p), lambda i: (i, 0)),       # x tile
            pl.BlockSpec((width_p, 2 * L_p), lambda i: (0, 0)),  # W_uv (once)
            pl.BlockSpec((1, 2 * L_p), lambda i: (0, 0)),        # b_uv (once)
            pl.BlockSpec((L_p, width_p), lambda i: (0, 0)),      # W_down (once)
            pl.BlockSpec((1, width_p), lambda i: (0, 0)),        # b_down (once)
        ]
        out_specs = pl.BlockSpec((bm, width_p), lambda i: (i, 0))
        kernel, scratch, dims = _swiglu_resident_kernel, [], ("parallel",)
    else:
        grid = (n_bt, n_l)
        in_specs = [
            pl.BlockSpec((bm, width_p), lambda i, l: (i, 0)),    # x tile
            pl.BlockSpec((width_p, 2 * tl), lambda i, l: (0, l)),  # W_uv tile
            pl.BlockSpec((1, 2 * tl), lambda i, l: (0, l)),        # b_uv tile
            pl.BlockSpec((tl, width_p), lambda i, l: (l, 0)),      # W_down tile
            pl.BlockSpec((1, width_p), lambda i, l: (0, 0)),       # b_down
        ]
        out_specs = pl.BlockSpec((bm, width_p), lambda i, l: (i, 0))
        kernel = _swiglu_stream_kernel
        scratch = [pltpu.VMEM((bm, width_p), jnp.float32)]
        dims = ("parallel", "arbitrary")

    out_p = pl.pallas_call(
        kernel,
        out_shape=jax.ShapeDtypeStruct((B_p, width_p), out_dtype),
        grid_spec=pltpu.PrefetchScalarGridSpec(
            num_scalar_prefetch=0,
            grid=grid,
            in_specs=in_specs,
            out_specs=out_specs,
            scratch_shapes=scratch,
        ),
        compiler_params=pltpu.CompilerParams(
            dimension_semantics=dims,
            vmem_limit_bytes=budget,
        ),
        cost_estimate=cost,
    )(x2, w_uv, b_uv, w_d, b_d)

    out = out_p[:B, :width] if (pad_b or pad_w) else out_p
    return out.reshape(lead + (width,))


def swiglu(x, w_up, b_up, w_down, b_down, **kwargs):
    """Convenience one-shot wrapper (prep + apply). Prefer calling
    prepare_swiglu_params() once and swiglu_apply() per step."""
    compute_dtype = kwargs.pop("compute_dtype", jnp.bfloat16)
    params = prepare_swiglu_params(w_up, b_up, w_down, b_down,
                                   compute_dtype=compute_dtype)
    return swiglu_apply(x, params, **kwargs)


def swiglu_ref(x, w_up, b_up, w_down, b_down):
    """Pure-JAX f32 reference for correctness checking."""
    h = x @ w_up + b_up
    L = w_up.shape[1] // 2
    u, v = h[..., :L], h[..., L:]
    return (u * (v * jax.nn.sigmoid(v))) @ w_down + b_down


if __name__ == "__main__":
    key = jax.random.PRNGKey(0)

    # --- Config A: the shipped module config (width=48 -> large_width=128) ---
    width = 48
    large_width = int(width * 8 / 3)          # 128
    k = jax.random.split(key, 6)
    x = jax.random.normal(k[0], (4, 16, width), dtype=jnp.float32)   # 64 tokens
    w_up = jax.random.normal(k[1], (width, 2 * large_width), jnp.float32) * 0.05
    b_up = jax.random.normal(k[2], (2 * large_width,), jnp.float32) * 0.05
    w_down = jax.random.normal(k[3], (large_width, width), jnp.float32) * 0.05
    b_down = jax.random.normal(k[4], (width,), jnp.float32) * 0.05

    ref = swiglu_ref(x, w_up, b_up, w_down, b_down)

    # Resident-weights path, f32 MXU operands (tight tolerance).
    p_f32 = prepare_swiglu_params(w_up, b_up, w_down, b_down,
                                  compute_dtype=jnp.float32)
    out_f32 = jax.block_until_ready(swiglu_apply(x, p_f32))
    assert out_f32.shape == ref.shape
    assert jnp.allclose(out_f32, ref, atol=1e-4, rtol=1e-4)

    # Resident-weights path, bf16 MXU operands (default).
    p_bf16 = prepare_swiglu_params(w_up, b_up, w_down, b_down)
    out_bf16 = jax.block_until_ready(swiglu_apply(x, p_bf16))
    assert out_bf16.shape == ref.shape
    assert jnp.allclose(out_bf16, ref, atol=3e-2, rtol=3e-2)

    # --- Config B: force the streamed / accumulating path (L tiled) ----------
    width_b = 128
    large_b = int(width_b * 8 / 3)            # 341 -> L_p=384, 3 L-tiles of 128
    xb = jax.random.normal(k[5], (64, width_b), jnp.float32)
    kb = jax.random.split(jax.random.PRNGKey(1), 4)
    w_up_b = jax.random.normal(kb[0], (width_b, 2 * large_b), jnp.float32) * 0.05
    b_up_b = jax.random.normal(kb[1], (2 * large_b,), jnp.float32) * 0.05
    w_down_b = jax.random.normal(kb[2], (large_b, width_b), jnp.float32) * 0.05
    b_down_b = jax.random.normal(kb[3], (width_b,), jnp.float32) * 0.05

    ref_b = swiglu_ref(xb, w_up_b, b_up_b, w_down_b, b_down_b)
    p_stream = prepare_swiglu_params(w_up_b, b_up_b, w_down_b, b_down_b,
                                     block_l=128, max_resident_bytes=0,
                                     compute_dtype=jnp.float32)
    out_b = jax.block_until_ready(swiglu_apply(xb, p_stream))
    assert out_b.shape == ref_b.shape
    assert jnp.allclose(out_b, ref_b, atol=1e-4, rtol=1e-4)

    print("KERNEL_OK")
</pallas_src>

<mosaic_0001>
module attributes {stable_mosaic.version = 11 : i64} {
  func.func @_swiglu_resident_kernel(%arg0: i32, %arg1: memref<32x128xf32, #tpu.memory_space<vmem>>, %arg2: memref<128x256xf32, #tpu.memory_space<vmem>>, %arg3: memref<1x256xf32, #tpu.memory_space<vmem>>, %arg4: memref<128x128xf32, #tpu.memory_space<vmem>>, %arg5: memref<1x128xf32, #tpu.memory_space<vmem>>, %arg6: memref<32x128xf32, #tpu.memory_space<vmem>>) attributes {dimension_semantics = [#tpu.dimension_semantics<parallel>], iteration_bounds = array<i64: 2>, scalar_prefetch = 0 : i64, scratch_operands = 0 : i64, tpu.core_type = #tpu.core_type<tc>, window_params = [{transform_indices = @transform_0, window_bounds = array<i64: 32, 128>}, {pipeline_mode = #tpu.pipeline_mode<synchronous>, transform_indices = @transform_1, window_bounds = array<i64: 128, 256>}, {pipeline_mode = #tpu.pipeline_mode<synchronous>, transform_indices = @transform_2, window_bounds = array<i64: 1, 256>}, {pipeline_mode = #tpu.pipeline_mode<synchronous>, transform_indices = @transform_3, window_bounds = array<i64: 128, 128>}, {pipeline_mode = #tpu.pipeline_mode<synchronous>, transform_indices = @transform_4, window_bounds = array<i64: 1, 128>}, {transform_indices = @transform_5, window_bounds = array<i64: 32, 128>}]} {
    %c0 = arith.constant 0 : index
    %c0_0 = arith.constant 0 : index
    %0 = vector.load %arg1[%c0, %c0_0] : memref<32x128xf32, #tpu.memory_space<vmem>>, vector<32x128xf32>
    %c0_1 = arith.constant 0 : index
    %c0_2 = arith.constant 0 : index
    %1 = vector.load %arg2[%c0_1, %c0_2] : memref<128x256xf32, #tpu.memory_space<vmem>>, vector<128x256xf32>
    %cst = arith.constant dense<0.000000e+00> : vector<32x256xf32>
    %2 = tpu.matmul %0, %1, %cst {dimension_numbers = #tpu.dot_dimension_numbers<[1], [0], [0], [1], [0, 0, 1, 1], [], []>} : vector<32x128xf32>, vector<128x256xf32>, vector<32x256xf32> -> vector<32x256xf32>
    %c0_3 = arith.constant 0 : index
    %c0_4 = arith.constant 0 : index
    %3 = vector.load %arg3[%c0_3, %c0_4] : memref<1x256xf32, #tpu.memory_space<vmem>>, vector<1x256xf32>
    %4 = vector.broadcast %3 : vector<1x256xf32> to vector<32x256xf32>
    %5 = arith.addf %2, %4 : vector<32x256xf32>
    %6 = vector.extract_strided_slice %5 {offsets = [0, 0], sizes = [32, 128], strides = [1, 1]} : vector<32x256xf32> to vector<32x128xf32>
    %7 = vector.extract_strided_slice %5 {offsets = [0, 128], sizes = [32, 128], strides = [1, 1]} : vector<32x256xf32> to vector<32x128xf32>
    %8 = arith.negf %7 : vector<32x128xf32>
    %9 = math.exp %8 : vector<32x128xf32>
    %cst_5 = arith.constant 1.000000e+00 : f32
    %10 = vector.broadcast %cst_5 : f32 to vector<32x128xf32>
    %11 = arith.addf %10, %9 : vector<32x128xf32>
    %12 = arith.divf %10, %11 : vector<32x128xf32>
    %13 = arith.mulf %7, %12 : vector<32x128xf32>
    %14 = arith.mulf %6, %13 : vector<32x128xf32>
    %c0_6 = arith.constant 0 : index
    %c0_7 = arith.constant 0 : index
    %15 = vector.load %arg4[%c0_6, %c0_7] : memref<128x128xf32, #tpu.memory_space<vmem>>, vector<128x128xf32>
    %cst_8 = arith.constant dense<0.000000e+00> : vector<32x128xf32>
    %16 = tpu.matmul %14, %15, %cst_8 {dimension_numbers = #tpu.dot_dimension_numbers<[1], [0], [0], [1], [0, 0, 1, 1], [], []>} : vector<32x128xf32>, vector<128x128xf32>, vector<32x128xf32> -> vector<32x128xf32>
    %c0_9 = arith.constant 0 : index
    %c0_10 = arith.constant 0 : index
    %17 = vector.load %arg5[%c0_9, %c0_10] : memref<1x128xf32, #tpu.memory_space<vmem>>, vector<1x128xf32>
    %18 = vector.broadcast %17 : vector<1x128xf32> to vector<32x128xf32>
    %19 = arith.addf %16, %18 : vector<32x128xf32>
    %c0_11 = arith.constant 0 : index
    %c0_12 = arith.constant 0 : index
    %20 = vector.load %arg6[%c0_11, %c0_12] : memref<32x128xf32, #tpu.memory_space<vmem>>, vector<32x128xf32>
    tpu.vector_store %arg6[%c0_11, %c0_12], %19 {strides = array<i32>} : memref<32x128xf32, #tpu.memory_space<vmem>>, vector<32x128xf32>,
    return
  }
  func.func @transform_0(%arg0: i32) -> (i32, i32) {
    %c0_i32 = arith.constant 0 : i32
    %c0_i32_0 = arith.constant 0 : i32
    return %arg0, %c0_i32 : i32, i32
  }
  func.func @transform_1(%arg0: i32) -> (i32, i32) {
    %c0_i32 = arith.constant 0 : i32
    %c0_i32_0 = arith.constant 0 : i32
    %c0_i32_1 = arith.constant 0 : i32
    return %c0_i32, %c0_i32_0 : i32, i32
  }
  func.func @transform_2(%arg0: i32) -> (i32, i32) {
    %c0_i32 = arith.constant 0 : i32
    %c0_i32_0 = arith.constant 0 : i32
    %c0_i32_1 = arith.constant 0 : i32
    return %c0_i32, %c0_i32_0 : i32, i32
  }
  func.func @transform_3(%arg0: i32) -> (i32, i32) {
    %c0_i32 = arith.constant 0 : i32
    %c0_i32_0 = arith.constant 0 : i32
    %c0_i32_1 = arith.constant 0 : i32
    return %c0_i32, %c0_i32_0 : i32, i32
  }
  func.func @transform_4(%arg0: i32) -> (i32, i32) {
    %c0_i32 = arith.constant 0 : i32
    %c0_i32_0 = arith.constant 0 : i32
    %c0_i32_1 = arith.constant 0 : i32
    return %c0_i32, %c0_i32_0 : i32, i32
  }
  func.func @transform_5(%arg0: i32) -> (i32, i32) {
    %c0_i32 = arith.constant 0 : i32
    %c0_i32_0 = arith.constant 0 : i32
    return %arg0, %c0_i32 : i32, i32
  }
}

</mosaic_0001>

<llo_original>
// kernel: tpu_custom_call.1
$region0: #{tpu_custom_call.1}
  #allocation0 [shape = 'u32[]', space=smem, size = 0x4, offset = 0x4, fixed_abs, tag = 'smem constant byte address 0x4 - core index']
  #allocation1 [shape = 'u32[72,128]{1,0:T(1,128)}', space=vmem, size = 0x9000, scoped, tag = 'internal scratch']
  %s0 = inlined_call_operand.hbm [shape: f32[64,128], index: 0, kind: input, shape index: {}]
  %s1 = inlined_call_operand.hbm [shape: f32[128,256], index: 1, kind: input, shape index: {}]
  %s2 = inlined_call_operand.hbm [shape: f32[1,256], index: 2, kind: input, shape index: {}]
  %s3 = inlined_call_operand.hbm [shape: f32[128,128], index: 3, kind: input, shape index: {}]
  %s4 = inlined_call_operand.vmem [shape: f32[1,128], index: 4, kind: input, shape index: {}]
  %s5 = inlined_call_operand.hbm [shape: f32[64,128], index: 5, kind: output, shape index: {}]
  %s6 = sld [smem:[#allocation0]]
  $region69: #{tpu_custom_call.1} parent=0
    _
  %s8 = ssub.s32 1, %s6
  %s9 = scalar_select 0, %s8, %s6
  $region1: #{tpu_custom_call.1} parent=0
    #allocation2 [shape = 'u8[32768]{0}', space=vmem, size = 0x8000, scoped, tag = 'input window, operand 0']
    #allocation3 [shape = 's32[2]{0}', space=sflag, size = 0x8, scoped, tag = 'scoped memory for tpu_custom_call.1']
    #allocation4 [shape = 's32[2]{0}', space=sflag, size = 0x8, scoped, tag = 'scoped memory for tpu_custom_call.1']
    #allocation5 [shape = 'u8[131072]{0}', space=vmem, size = 0x20000, scoped, tag = 'input window, operand 1, single buffered']
    #allocation6 [shape = 's32[1]{0}', space=sflag, size = 0x4, scoped, tag = 'scoped memory for tpu_custom_call.1']
    #allocation7 [shape = 'u8[1024]{0}', space=vmem, size = 0x400, scoped, tag = 'input window, operand 2, single buffered']
    #allocation8 [shape = 'u8[65536]{0}', space=vmem, size = 0x10000, scoped, tag = 'input window, operand 3, single buffered']
    #allocation9 [shape = 's32[1]{0}', space=sflag, size = 0x4, scoped, tag = 'scoped memory for tpu_custom_call.1']
    #allocation10 [shape = 'u8[32768]{0}', space=vmem, size = 0x8000, scoped, tag = 'output window, operand 0']
    %10 = vsyncpa [#allocation3], 0
    %s11 = scalar_lea.sflag [#allocation3], 1
    %12 = vsyncpa %s11, 0
    %13 = vsyncpa [#allocation6], 0
    %14 = vsyncpa [#allocation9], 0
    %15 = vsyncpa [#allocation4], 0
    %s16 = scalar_lea.sflag [#allocation4], 1
    %17 = vsyncpa %s16, 0
    loop: start=0, step=1, limit=4
    $region2: #{tpu_custom_call.1} parent=1 // loop_pre_header
      _
    $region3: #{tpu_custom_call.1} parent=1 // loop_header
      %s19 = sphi 0, %s23
      %p20 = scmp.ge.s32.totalorder %s19, 4
      %s29 = sphi 0, %s31
      %s32 = sphi 0, %s29
      %s33 = sphi 0, %s32
      %s49 = sphi 0, %s33
      %s53 = sphi 0, %s53
      %s55 = sphi 0, %s53
      %s56 = sphi 0, %s55
      %s70 = sphi 0, %s56
      %s74 = sphi 0, %s74
      %s76 = sphi 0, %s74
      %s77 = sphi 0, %s76
      %s91 = sphi 0, %s77
      %s95 = sphi 0, %s95
      %s97 = sphi 0, %s95
      %s98 = sphi 0, %s97
      %s112 = sphi 0, %s98
      %s116 = sphi 0, %s116
      %s118 = sphi 0, %s116
      %s119 = sphi 0, %s118
      %s133 = sphi 0, %s119
      %s139 = sphi 0, %s141
      %s142 = sphi 0, %s139
      %s143 = sphi 0, %s142
      %s159 = sphi 0, %s143
    $region4: #{tpu_custom_call.1} parent=1 // loop_header_branch
      %22 = sbr.rel (%p20) target = $region8
    $region5: #{tpu_custom_call.1} parent=1 // loop_body
      %s24 = ssub.s32 %s19, 1
      %s25 = ssub.s32 %s19, 2
      %s26 = sadd.s32 %s19, 1
      %s27 = ssub.s32 %s19, %s26
      %p28 = scmp.eq.s32.totalorder %s27, 0
      %s30 = sadd.s32 %s29, 1
      %s31 = scalar_select %p28, %s29, %s30
      %p34 = pneg %p28
      %p35 = scmp.eq.s32.totalorder %s19, 1
      %p36 = por %p34, %p35
      %p37 = scmp.ne.s32.totalorder %s29, %s32
      %p38 = scmp.eq.s32.totalorder %s19, 0
      %p39 = por %p37, %p38
      %p40 = scmp.ne.s32.totalorder %s29, %s32
      %p41 = scmp.eq.s32.totalorder %s24, 1
      %p42 = por %p40, %p41
      %p43 = scmp.ne.s32.totalorder %s32, %s33
      %p44 = scmp.eq.s32.totalorder %s24, 0
      %p45 = por %p43, %p44
      %p46 = scmp.ne.s32.totalorder %s32, %s33
      %p47 = scmp.eq.s32.totalorder %s25, 1
      %p48 = por %p46, %p47
      %p50 = scmp.ne.s32.totalorder %s33, %s49
      %p51 = scmp.eq.s32.totalorder %s25, 0
      %p52 = por %p50, %p51
      %s54 = sadd.s32 %s53, 1
      %p57 = scmp.eq.s32.totalorder %s19, 1
      %p58 = scmp.ne.s32.totalorder %s53, %s55
      %p59 = scmp.eq.s32.totalorder %s19, 0
      %p60 = por %p58, %p59
      %p61 = scmp.ne.s32.totalorder %s53, %s55
      %p62 = scmp.eq.s32.totalorder %s24, 1
      %p63 = por %p61, %p62
      %p64 = scmp.ne.s32.totalorder %s55, %s56
      %p65 = scmp.eq.s32.totalorder %s24, 0
      %p66 = por %p64, %p65
      %p67 = scmp.ne.s32.totalorder %s55, %s56
      %p68 = scmp.eq.s32.totalorder %s25, 1
      %p69 = por %p67, %p68
      %p71 = scmp.ne.s32.totalorder %s56, %s70
      %p72 = scmp.eq.s32.totalorder %s25, 0
      %p73 = por %p71, %p72
      %s75 = sadd.s32 %s74, 1
      %p78 = scmp.eq.s32.totalorder %s19, 1
      %p79 = scmp.ne.s32.totalorder %s74, %s76
      %p80 = scmp.eq.s32.totalorder %s19, 0
      %p81 = por %p79, %p80
      %p82 = scmp.ne.s32.totalorder %s74, %s76
      %p83 = scmp.eq.s32.totalorder %s24, 1
      %p84 = por %p82, %p83
      %p85 = scmp.ne.s32.totalorder %s76, %s77
      %p86 = scmp.eq.s32.totalorder %s24, 0
      %p87 = por %p85, %p86
      %p88 = scmp.ne.s32.totalorder %s76, %s77
      %p89 = scmp.eq.s32.totalorder %s25, 1
      %p90 = por %p88, %p89
      %p92 = scmp.ne.s32.totalorder %s77, %s91
      %p93 = scmp.eq.s32.totalorder %s25, 0
      %p94 = por %p92, %p93
      %s96 = sadd.s32 %s95, 1
      %p99 = scmp.eq.s32.totalorder %s19, 1
      %p100 = scmp.ne.s32.totalorder %s95, %s97
      %p101 = scmp.eq.s32.totalorder %s19, 0
      %p102 = por %p100, %p101
      %p103 = scmp.ne.s32.totalorder %s95, %s97
      %p104 = scmp.eq.s32.totalorder %s24, 1
      %p105 = por %p103, %p104
      %p106 = scmp.ne.s32.totalorder %s97, %s98
      %p107 = scmp.eq.s32.totalorder %s24, 0
      %p108 = por %p106, %p107
      %p109 = scmp.ne.s32.totalorder %s97, %s98
      %p110 = scmp.eq.s32.totalorder %s25, 1
      %p111 = por %p109, %p110
      %p113 = scmp.ne.s32.totalorder %s98, %s112
      %p114 = scmp.eq.s32.totalorder %s25, 0
      %p115 = por %p113, %p114
      %s117 = sadd.s32 %s116, 1
      %p120 = scmp.eq.s32.totalorder %s19, 1
      %p121 = scmp.ne.s32.totalorder %s116, %s118
      %p122 = scmp.eq.s32.totalorder %s19, 0
      %p123 = por %p121, %p122
      %p124 = scmp.ne.s32.totalorder %s116, %s118
      %p125 = scmp.eq.s32.totalorder %s24, 1
      %p126 = por %p124, %p125
      %p127 = scmp.ne.s32.totalorder %s118, %s119
      %p128 = scmp.eq.s32.totalorder %s24, 0
      %p129 = por %p127, %p128
      %p130 = scmp.ne.s32.totalorder %s118, %s119
      %p131 = scmp.eq.s32.totalorder %s25, 1
      %p132 = por %p130, %p131
      %p134 = scmp.ne.s32.totalorder %s119, %s133
      %p135 = scmp.eq.s32.totalorder %s25, 0
      %p136 = por %p134, %p135
      %s137 = ssub.s32 %s19, %s26
      %p138 = scmp.eq.s32.totalorder %s137, 0
      %s140 = sadd.s32 %s139, 1
      %s141 = scalar_select %p138, %s139, %s140
      %p144 = pneg %p138
      %p145 = scmp.eq.s32.totalorder %s19, 1
      %p146 = por %p144, %p145
      %p147 = scmp.ne.s32.totalorder %s139, %s142
      %p148 = scmp.eq.s32.totalorder %s19, 0
      %p149 = por %p147, %p148
      %p150 = scmp.ne.s32.totalorder %s139, %s142
      %p151 = scmp.eq.s32.totalorder %s24, 1
      %p152 = por %p150, %p151
      %p153 = scmp.ne.s32.totalorder %s142, %s143
      %p154 = scmp.eq.s32.totalorder %s24, 0
      %p155 = por %p153, %p154
      %p156 = scmp.ne.s32.totalorder %s142, %s143
      %p157 = scmp.eq.s32.totalorder %s25, 1
      %p158 = por %p156, %p157
      %p160 = scmp.ne.s32.totalorder %s143, %s159
      %p161 = scmp.eq.s32.totalorder %s25, 0
      %p162 = por %p160, %p161
      %p163 = scmp.le.s32.totalorder 1, %s19
      %p164 = scmp.lt.s32.totalorder %s19, 3
      %p165 = pnand %p163, %p164
      %p166 = pneg %p165
      // Predicated region
      $region9: #{tpu_custom_call.1} parent=5 // pred_check
        _
      $region10: #{tpu_custom_call.1} parent=5 // pred_check_branch
        %168 = sbr.rel (%p165) target = $region12
      $region11: #{tpu_custom_call.1} parent=5 // pred_region
        %s169 = ssub.s32 %s19, 1
        // Predicated region
        $region13: #{tpu_custom_call.1} parent=11 // pred_check
          %p170 = pneg %p66
        $region14: #{tpu_custom_call.1} parent=11 // pred_check_branch
          %172 = sbr.rel (%p170) target = $region16
        $region15: #{tpu_custom_call.1} parent=11 // pred_region
          %174 = vsyncadd [#allocation6], 0
          %s175 = sshll.u32 %s1, 4
          %s176 = int_to_ptr.hbm [resolvable:$true] %s175
          %s177 = sshll.u32 [#allocation5], 4
          %s178 = int_to_ptr.vmem [resolvable:$true] %s177
          %183 = dma.hbm_to_vmem [thread:$0]  %s176, 4096, %s178, [#allocation6], 256, 256, 16
        $region16: #{tpu_custom_call.1} parent=11 // pred_fallthru
          _
        // Predicated region
        $region17: #{tpu_custom_call.1} parent=11 // pred_check
          %p184 = pneg %p87
        $region18: #{tpu_custom_call.1} parent=11 // pred_check_branch
          %186 = sbr.rel (%p184) target = $region20
        $region19: #{tpu_custom_call.1} parent=11 // pred_region
          %188 = vsyncadd [#allocation6], 0
          %s190 = sshll.u32 %s2, 4
          %s191 = int_to_ptr.hbm [resolvable:$true] %s190
          %s192 = sshll.u32 [#allocation7], 4
          %s193 = int_to_ptr.vmem [resolvable:$true] %s192
          %195 = dma.hbm_to_vmem [thread:$0]  %s191, 32, %s193, [#allocation6]
        $region20: #{tpu_custom_call.1} parent=11 // pred_fallthru
          _
        // Predicated region
        $region21: #{tpu_custom_call.1} parent=11 // pred_check
          %p196 = pneg %p108
        $region22: #{tpu_custom_call.1} parent=11 // pred_check_branch
          %198 = sbr.rel (%p196) target = $region24
        $region23: #{tpu_custom_call.1} parent=11 // pred_region
          %200 = vsyncadd [#allocation9], 0
          %s201 = sshll.u32 %s3, 4
          %s202 = int_to_ptr.hbm [resolvable:$true] %s201
          %s203 = sshll.u32 [#allocation8], 4
          %s204 = int_to_ptr.vmem [resolvable:$true] %s203
          %209 = dma.hbm_to_vmem [thread:$0]  %s202, 2048, %s204, [#allocation9], 128, 128, 8
        $region24: #{tpu_custom_call.1} parent=11 // pred_fallthru
          _
        // Predicated region
        $region25: #{tpu_custom_call.1} parent=11 // pred_check
          %p210 = pneg %p129
        $region26: #{tpu_custom_call.1} parent=11 // pred_check_branch
          %212 = sbr.rel (%p210) target = $region28
        $region27: #{tpu_custom_call.1} parent=11 // pred_region
          _
        $region28: #{tpu_custom_call.1} parent=11 // pred_fallthru
          _
      $region12: #{tpu_custom_call.1} parent=5 // pred_fallthru
        _
      %p213 = scmp.lt.s32.totalorder %s19, 2
      // Predicated region
      $region29: #{tpu_custom_call.1} parent=5 // pred_check
        %p214 = pneg %p213
      $region30: #{tpu_custom_call.1} parent=5 // pred_check_branch
        %216 = sbr.rel (%p214) target = $region32
      $region31: #{tpu_custom_call.1} parent=5 // pred_region
        // Predicated region
        $region33: #{tpu_custom_call.1} parent=31 // pred_check
          %p217 = pneg %p39
        $region34: #{tpu_custom_call.1} parent=31 // pred_check_branch
          %219 = sbr.rel (%p217) target = $region36
        $region35: #{tpu_custom_call.1} parent=31 // pred_region
          %s220 = sand.u32 %s29, 1
          %s221 = scalar_lea.sflag [#allocation3], %s220
          %s222 = sand.u32 %s29, 1
          %s223 = smul.addr %s222, 32
          %s224 = scalar_lea.vmem [#allocation2], %s223
          %s225 = smul.u32 4, %s19
          %227 = vsyncadd %s221, 0
          %s228 = smul.addr %s225, 8
          %s229 = scalar_lea.hbm %s0, %s228
          %s230 = sshll.u32 %s229, 4
          %s231 = int_to_ptr.hbm [resolvable:$true] %s230
          %s232 = sshll.u32 %s224, 4
          %s233 = int_to_ptr.vmem [resolvable:$true] %s232
          %238 = dma.hbm_to_vmem [thread:$0]  %s231, 512, %s233, %s221, 128, 128, 8
        $region36: #{tpu_custom_call.1} parent=31 // pred_fallthru
          _
      $region32: #{tpu_custom_call.1} parent=5 // pred_fallthru
        _
      %p239 = scmp.le.s32.totalorder 1, %s19
      %p240 = scmp.lt.s32.totalorder %s19, 3
      %p241 = pnand %p239, %p240
      %p242 = pneg %p241
      // Predicated region
      $region37: #{tpu_custom_call.1} parent=5 // pred_check
        _
      $region38: #{tpu_custom_call.1} parent=5 // pred_check_branch
        %244 = sbr.rel (%p241) target = $region40
      $region39: #{tpu_custom_call.1} parent=5 // pred_region
        %s245 = ssub.s32 %s19, 1
        %s246 = sand.u32 %s32, 1
        %s247 = scalar_lea.sflag [#allocation3], %s246
        %s248 = sand.u32 %s32, 1
        %s249 = smul.addr %s248, 32
        %s250 = scalar_lea.vmem [#allocation2], %s249
        // Predicated region
        $region41: #{tpu_custom_call.1} parent=39 // pred_check
          %p251 = pneg %p45
        $region42: #{tpu_custom_call.1} parent=39 // pred_check_branch
          %253 = sbr.rel (%p251) target = $region44
        $region43: #{tpu_custom_call.1} parent=39 // pred_region
          %255 = dma.done %s247, 512
        $region44: #{tpu_custom_call.1} parent=39 // pred_fallthru
          _
        // Predicated region
        $region45: #{tpu_custom_call.1} parent=39 // pred_check
          %p256 = pneg %p66
        $region46: #{tpu_custom_call.1} parent=39 // pred_check_branch
          %258 = sbr.rel (%p256) target = $region48
        $region47: #{tpu_custom_call.1} parent=39 // pred_region
          %260 = dma.done [#allocation6], 4096
        $region48: #{tpu_custom_call.1} parent=39 // pred_fallthru
          _
        // Predicated region
        $region49: #{tpu_custom_call.1} parent=39 // pred_check
          %p261 = pneg %p87
        $region50: #{tpu_custom_call.1} parent=39 // pred_check_branch
          %263 = sbr.rel (%p261) target = $region52
        $region51: #{tpu_custom_call.1} parent=39 // pred_region
          %265 = dma.done [#allocation6], 32
        $region52: #{tpu_custom_call.1} parent=39 // pred_fallthru
          _
        // Predicated region
        $region53: #{tpu_custom_call.1} parent=39 // pred_check
          %p266 = pneg %p108
        $region54: #{tpu_custom_call.1} parent=39 // pred_check_branch
          %268 = sbr.rel (%p266) target = $region56
        $region55: #{tpu_custom_call.1} parent=39 // pred_region
          %270 = dma.done [#allocation9], 2048
        $region56: #{tpu_custom_call.1} parent=39 // pred_fallthru
          _
        %s271 = sand.u32 %s32, 1
        %s272 = scalar_lea.sflag [#allocation3], %s271
        %s273 = sand.u32 %s32, 1
        %s274 = smul.addr %s273, 32
        %s275 = scalar_lea.vmem [#allocation2], %s274
        %p276 = pneg %p45
        %p277 = pneg %p42
        %p278 = pneg %p66
        %p279 = pneg %p63
        %p280 = pneg %p87
        %p281 = pneg %p84
        %p282 = pneg %p108
        %p283 = pneg %p105
        %p284 = pneg %p129
        %p285 = pneg %p126
        %p286 = pneg %p155
        %p287 = pneg %p152
        %s288 = sand.u32 %s142, 1
        %s289 = scalar_lea.sflag [#allocation4], %s288
        %s290 = sand.u32 %s142, 1
        %s291 = smul.addr %s290, 32
        %s292 = scalar_lea.vmem [#allocation10], %s291
        %s293 = smul.u32 4, %s24
        %s294 = smul.u32 4, %s24
        %v295 = vld [vmem:[%s250] sm:$0xff]
        %v296 = vld [vmem:[%s250 + $0x8] sm:$0xff]
        %v297 = vld [vmem:[%s250 + $0x10] sm:$0xff]
        %v298 = vld [vmem:[%s250 + $0x18] sm:$0xff]
        %v299 = vld [vmem:[#allocation5] sm:$0xff]
        %v300 = vld [vmem:[#allocation5 + $0x8] sm:$0xff]
        %v301 = vld [vmem:[#allocation5 + $0x10] sm:$0xff]
        %v302 = vld [vmem:[#allocation5 + $0x18] sm:$0xff]
        %v303 = vld [vmem:[#allocation5 + $0x20] sm:$0xff]
        %v304 = vld [vmem:[#allocation5 + $0x28] sm:$0xff]
        %v305 = vld [vmem:[#allocation5 + $0x30] sm:$0xff]
        %v306 = vld [vmem:[#allocation5 + $0x38] sm:$0xff]
        %v307 = vld [vmem:[#allocation5 + $0x40] sm:$0xff]
        %v308 = vld [vmem:[#allocation5 + $0x48] sm:$0xff]
        %v309 = vld [vmem:[#allocation5 + $0x50] sm:$0xff]
        %v310 = vld [vmem:[#allocation5 + $0x58] sm:$0xff]
        %v311 = vld [vmem:[#allocation5 + $0x60] sm:$0xff]
        %v312 = vld [vmem:[#allocation5 + $0x68] sm:$0xff]
        %v313 = vld [vmem:[#allocation5 + $0x70] sm:$0xff]
        %v314 = vld [vmem:[#allocation5 + $0x78] sm:$0xff]
        %v315 = vld [vmem:[#allocation5 + $0x80] sm:$0xff]
        %v316 = vld [vmem:[#allocation5 + $0x88] sm:$0xff]
        %v317 = vld [vmem:[#allocation5 + $0x90] sm:$0xff]
        %v318 = vld [vmem:[#allocation5 + $0x98] sm:$0xff]
        %v319 = vld [vmem:[#allocation5 + $0xa0] sm:$0xff]
        %v320 = vld [vmem:[#allocation5 + $0xa8] sm:$0xff]
        %v321 = vld [vmem:[#allocation5 + $0xb0] sm:$0xff]
        %v322 = vld [vmem:[#allocation5 + $0xb8] sm:$0xff]
        %v323 = vld [vmem:[#allocation5 + $0xc0] sm:$0xff]
        %v324 = vld [vmem:[#allocation5 + $0xc8] sm:$0xff]
        %v325 = vld [vmem:[#allocation5 + $0xd0] sm:$0xff]
        %v326 = vld [vmem:[#allocation5 + $0xd8] sm:$0xff]
        %v327 = vld [vmem:[#allocation5 + $0xe0] sm:$0xff]
        %v328 = vld [vmem:[#allocation5 + $0xe8] sm:$0xff]
        %v329 = vld [vmem:[#allocation5 + $0xf0] sm:$0xff]
        %v330 = vld [vmem:[#allocation5 + $0xf8] sm:$0xff]
        %v331 = vld [vmem:[#allocation7] sm:$0x3]
        %v333 = vperm.slane %v331, 0
        %v334 = vperm.slane %v331, 1
        %337 = vmatpush.msra.mxu0 %v329
        %338 = vmatpush.msra.mxu0 %v327
        %339 = vmatpush.msra.mxu0 %v325
        %340 = vmatpush.msra.mxu0 %v323
        %341 = vmatpush.msra.mxu0 %v321
        %342 = vmatpush.msra.mxu0 %v319
        %343 = vmatpush.msra.mxu0 %v317
        %344 = vmatpush.msra.mxu0 %v315
        %345 = vmatpush.msra.mxu0 %v313
        %346 = vmatpush.msra.mxu0 %v311
        %347 = vmatpush.msra.mxu0 %v309
        %348 = vmatpush.msra.mxu0 %v307
        %349 = vmatpush.msra.mxu0 %v305
        %350 = vmatpush.msra.mxu0 %v303
        %351 = vmatpush.msra.mxu0 %v301
        %352 = vmatpush.msra.mxu0 %v299
        %353 = vmatmul.f32.gmra.mxu0 %v295
        %v354 = vpop.f32.mrf.mxu0
        %v355 = vadd.f32 %v333, %v354
        %356 = vmatmul.f32.gmra.mxu0 %v296
        %v357 = vpop.f32.mrf.mxu0
        %v358 = vadd.f32 %v333, %v357
        %359 = vmatmul.f32.gmra.mxu0 %v297
        %v360 = vpop.f32.mrf.mxu0
        %v361 = vadd.f32 %v333, %v360
        %362 = vmatmul.f32.gmra.mxu0 %v298
        %v363 = vpop.f32.mrf.mxu0
        %v364 = vadd.f32 %v333, %v363
        %365 = vdwg.mxu0
        %366 = vmatpush.msra.mxu0 %v330
        %367 = vmatpush.msra.mxu0 %v328
        %368 = vmatpush.msra.mxu0 %v326
        %369 = vmatpush.msra.mxu0 %v324
        %370 = vmatpush.msra.mxu0 %v322
        %371 = vmatpush.msra.mxu0 %v320
        %372 = vmatpush.msra.mxu0 %v318
        %373 = vmatpush.msra.mxu0 %v316
        %374 = vmatpush.msra.mxu0 %v314
        %375 = vmatpush.msra.mxu0 %v312
        %376 = vmatpush.msra.mxu0 %v310
        %377 = vmatpush.msra.mxu0 %v308
        %378 = vmatpush.msra.mxu0 %v306
        %379 = vmatpush.msra.mxu0 %v304
        %380 = vmatpush.msra.mxu0 %v302
        %381 = vmatpush.msra.mxu0 %v300
        %382 = vmatmul.f32.gmra.mxu0 %v295
        %v383 = vpop.f32.mrf.mxu0
        %v384 = vadd.f32 %v334, %v383
        %385 = vmatmul.f32.gmra.mxu0 %v296
        %v386 = vpop.f32.mrf.mxu0
        %v387 = vadd.f32 %v334, %v386
        %388 = vmatmul.f32.gmra.mxu0 %v297
        %v389 = vpop.f32.mrf.mxu0
        %v390 = vadd.f32 %v334, %v389
        %391 = vmatmul.f32.gmra.mxu0 %v298
        %v392 = vpop.f32.mrf.mxu0
        %v393 = vadd.f32 %v334, %v392
        %394 = vdwg.mxu0
        %v395 = vxor.u32 %v384, 2147483648
        %v396 = vxor.u32 %v387, 2147483648
        %v397 = vxor.u32 %v390, 2147483648
        %v398 = vxor.u32 %v393, 2147483648
        %v399 = vmul.f32 %v395, 1.442695
        %v400 = vpow.pop %v399
        %v401 = vmul.f32 %v396, 1.442695
        %v402 = vpow.pop %v401
        %v403 = vmul.f32 %v397, 1.442695
        %v404 = vpow.pop %v403
        %v405 = vmul.f32 %v398, 1.442695
        %v406 = vpow.pop %v405
        %v407 = vadd.f32 %v400, 1.0
        %v408 = vadd.f32 %v402, 1.0
        %v409 = vadd.f32 %v404, 1.0
        %v410 = vadd.f32 %v406, 1.0
        %v411 = vrcp.pop %v407
        %v412 = vmul.f32 %v407, %v411
        %v413 = vsub.f32 1.0, %v412
        %v414 = vmul.f32 %v411, %v413
        %v415 = vadd.f32 %v411, %v414
        %vm416 = vweird.f32 %v407
        %vm417 = vweird.f32 %v411
        %vm418 = vmor %vm416, %vm417
        %v419 = vsel %vm418, %v411, %v415
        %v420 = vand.u32 2147483647, %v407
        %vm421 = vcmp.eq.f32.partialorder %v420, 8.507059e+37
        %v422 = vand.u32 %v407, 2147483648
        %v423 = vor.u32 1.1754944e-38, %v422
        %v424 = vsel %vm421, %v423, %v419
        %v425 = vmul.f32 1.0, %v424
        %v426 = vrcp.pop %v408
        %v427 = vmul.f32 %v408, %v426
        %v428 = vsub.f32 1.0, %v427
        %v429 = vmul.f32 %v426, %v428
        %v430 = vadd.f32 %v426, %v429
        %vm431 = vweird.f32 %v408
        %vm432 = vweird.f32 %v426
        %vm433 = vmor %vm431, %vm432
        %v434 = vsel %vm433, %v426, %v430
        %v435 = vand.u32 2147483647, %v408
        %vm436 = vcmp.eq.f32.partialorder %v435, 8.507059e+37
        %v437 = vand.u32 %v408, 2147483648
        %v438 = vor.u32 1.1754944e-38, %v437
        %v439 = vsel %vm436, %v438, %v434
        %v440 = vmul.f32 1.0, %v439
        %v441 = vrcp.pop %v409
        %v442 = vmul.f32 %v409, %v441
        %v443 = vsub.f32 1.0, %v442
        %v444 = vmul.f32 %v441, %v443
        %v445 = vadd.f32 %v441, %v444
        %vm446 = vweird.f32 %v409
        %vm447 = vweird.f32 %v441
        %vm448 = vmor %vm446, %vm447
        %v449 = vsel %vm448, %v441, %v445
        %v450 = vand.u32 2147483647, %v409
        %vm451 = vcmp.eq.f32.partialorder %v450, 8.507059e+37
        %v452 = vand.u32 %v409, 2147483648
        %v453 = vor.u32 1.1754944e-38, %v452
        %v454 = vsel %vm451, %v453, %v449
        %v455 = vmul.f32 1.0, %v454
        %v456 = vrcp.pop %v410
        %v457 = vmul.f32 %v410, %v456
        %v458 = vsub.f32 1.0, %v457
        %v459 = vmul.f32 %v456, %v458
        %v460 = vadd.f32 %v456, %v459
        %vm461 = vweird.f32 %v410
        %vm462 = vweird.f32 %v456
        %vm463 = vmor %vm461, %vm462
        %v464 = vsel %vm463, %v456, %v460
        %v465 = vand.u32 2147483647, %v410
        %vm466 = vcmp.eq.f32.partialorder %v465, 8.507059e+37
        %v467 = vand.u32 %v410, 2147483648
        %v468 = vor.u32 1.1754944e-38, %v467
        %v469 = vsel %vm466, %v468, %v464
        %v470 = vmul.f32 1.0, %v469
        %v471 = vmul.f32 %v384, %v425
        %v472 = vmul.f32 %v387, %v440
        %v473 = vmul.f32 %v390, %v455
        %v474 = vmul.f32 %v393, %v470
        %v475 = vmul.f32 %v355, %v471
        %v476 = vmul.f32 %v358, %v472
        %v477 = vmul.f32 %v361, %v473
        %v478 = vmul.f32 %v364, %v474
        %v479 = vld [vmem:[#allocation8] sm:$0xff]
        %v480 = vld [vmem:[#allocation8 + $0x8] sm:$0xff]
        %v481 = vld [vmem:[#allocation8 + $0x10] sm:$0xff]
        %v482 = vld [vmem:[#allocation8 + $0x18] sm:$0xff]
        %v483 = vld [vmem:[#allocation8 + $0x20] sm:$0xff]
        %v484 = vld [vmem:[#allocation8 + $0x28] sm:$0xff]
        %v485 = vld [vmem:[#allocation8 + $0x30] sm:$0xff]
        %v486 = vld [vmem:[#allocation8 + $0x38] sm:$0xff]
        %v487 = vld [vmem:[#allocation8 + $0x40] sm:$0xff]
        %v488 = vld [vmem:[#allocation8 + $0x48] sm:$0xff]
        %v489 = vld [vmem:[#allocation8 + $0x50] sm:$0xff]
        %v490 = vld [vmem:[#allocation8 + $0x58] sm:$0xff]
        %v491 = vld [vmem:[#allocation8 + $0x60] sm:$0xff]
        %v492 = vld [vmem:[#allocation8 + $0x68] sm:$0xff]
        %v493 = vld [vmem:[#allocation8 + $0x70] sm:$0xff]
        %v494 = vld [vmem:[#allocation8 + $0x78] sm:$0xff]
        %v495 = vld [vmem:[%s4] sm:$0x1]
        %v497 = vperm.slane %v495, 0
        %499 = vmatpush.msra.mxu0 %v494
        %500 = vmatpush.msra.mxu0 %v493
        %501 = vmatpush.msra.mxu0 %v492
        %502 = vmatpush.msra.mxu0 %v491
        %503 = vmatpush.msra.mxu0 %v490
        %504 = vmatpush.msra.mxu0 %v489
        %505 = vmatpush.msra.mxu0 %v488
        %506 = vmatpush.msra.mxu0 %v487
        %507 = vmatpush.msra.mxu0 %v486
        %508 = vmatpush.msra.mxu0 %v485
        %509 = vmatpush.msra.mxu0 %v484
        %510 = vmatpush.msra.mxu0 %v483
        %511 = vmatpush.msra.mxu0 %v482
        %512 = vmatpush.msra.mxu0 %v481
        %513 = vmatpush.msra.mxu0 %v480
        %514 = vmatpush.msra.mxu0 %v479
        %515 = vmatmul.f32.gmra.mxu0 %v475
        %v516 = vpop.f32.mrf.mxu0
        %v517 = vadd.f32 %v497, %v516
        %518 = vmatmul.f32.gmra.mxu0 %v476
        %v519 = vpop.f32.mrf.mxu0
        %v520 = vadd.f32 %v497, %v519
        %521 = vmatmul.f32.gmra.mxu0 %v477
        %v522 = vpop.f32.mrf.mxu0
        %v523 = vadd.f32 %v497, %v522
        %524 = vmatmul.f32.gmra.mxu0 %v478
        %v525 = vpop.f32.mrf.mxu0
        %v526 = vadd.f32 %v497, %v525
        %527 = vdwg.mxu0
        %528 = vst [vmem:[%s292] sm:$0xff] %v517
        %529 = vst [vmem:[%s292 + $0x8] sm:$0xff] %v520
        %530 = vst [vmem:[%s292 + $0x10] sm:$0xff] %v523
        %531 = vst [vmem:[%s292 + $0x18] sm:$0xff] %v526
        %s532 = sand.u32 %s142, 1
        %s533 = scalar_lea.sflag [#allocation4], %s532
        %s534 = sand.u32 %s142, 1
        %s535 = smul.addr %s534, 32
        %s536 = scalar_lea.vmem [#allocation10], %s535
        // Predicated region
        $region57: #{tpu_custom_call.1} parent=39 // pred_check
          %p537 = pneg %p152
        $region58: #{tpu_custom_call.1} parent=39 // pred_check_branch
          %539 = sbr.rel (%p537) target = $region60
        $region59: #{tpu_custom_call.1} parent=39 // pred_region
          %s540 = smul.u32 4, %s24
          %542 = vsyncadd %s533, 0
          %s543 = smul.addr %s540, 8
          %s544 = scalar_lea.hbm %s5, %s543
          %s545 = sshll.u32 %s536, 4
          %s546 = int_to_ptr.vmem [resolvable:$true] %s545
          %s547 = sshll.u32 %s544, 4
          %s548 = int_to_ptr.hbm [resolvable:$true] %s547
          %553 = dma.vmem_to_hbm [thread:$0]  %s546, 512, %s548, %s533, 128, 128, 8
        $region60: #{tpu_custom_call.1} parent=39 // pred_fallthru
          _
      $region40: #{tpu_custom_call.1} parent=5 // pred_fallthru
        _
      %p554 = scmp.le.s32.totalorder 2, %s19
      // Predicated region
      $region61: #{tpu_custom_call.1} parent=5 // pred_check
        %p555 = pneg %p554
      $region62: #{tpu_custom_call.1} parent=5 // pred_check_branch
        %557 = sbr.rel (%p555) target = $region64
      $region63: #{tpu_custom_call.1} parent=5 // pred_region
        %s558 = ssub.s32 %s19, 2
        // Predicated region
        $region65: #{tpu_custom_call.1} parent=63 // pred_check
          %p559 = pneg %p158
        $region66: #{tpu_custom_call.1} parent=63 // pred_check_branch
          %561 = sbr.rel (%p559) target = $region68
        $region67: #{tpu_custom_call.1} parent=63 // pred_region
          %s562 = sand.u32 %s143, 1
          %s563 = scalar_lea.sflag [#allocation4], %s562
          %s564 = sand.u32 %s143, 1
          %s565 = smul.addr %s564, 32
          %s566 = scalar_lea.vmem [#allocation10], %s565
          %568 = dma.done %s563, 512
        $region68: #{tpu_custom_call.1} parent=63 // pred_fallthru
          _
      $region64: #{tpu_custom_call.1} parent=5 // pred_fallthru
        _
    $region6: #{tpu_custom_call.1} parent=1 // loop_footer
      %s23 = sadd.s32 1, %s19
    $region7: #{tpu_custom_call.1} parent=1 // loop_footer_branch
      %18 = sbr.rel target = $region3
    $region8: #{tpu_custom_call.1} parent=1 // loop_exit
      _
    %569 = vsyncpa [#allocation3], 1
    %s570 = scalar_lea.sflag [#allocation3], 1
    %571 = vsyncpa %s570, 1
    %572 = vsyncpa [#allocation6], 1
    %573 = vsyncpa [#allocation9], 1
    %574 = vsyncpa [#allocation4], 1
    %s575 = scalar_lea.sflag [#allocation4], 1
    %576 = vsyncpa %s575, 1

</llo_original>
